<compile_context>
chip_gen: v5e
topology: v5e:2x2
jax: 0.10.0
libtpu: 0.0.40
codegen_flags: <defaults>
</compile_context>

<pallas_src>
import functools

import jax
import jax.numpy as jnp
from jax.experimental import pallas as pl
from jax.experimental.pallas import tpu as pltpu

LANES = 128               # vreg lane width
MAX_ROW_TILE = 8192       # 4 MiB / f32 input tile; x2 inputs x2 buffers = 16 MiB
VMEM_LIMIT_BYTES = 48 << 20


def _ipow(x, n):
    """x**n for positive integer n via square-and-multiply (VALU only, no EUP)."""
    acc = None
    base = x
    while n > 0:
        if n & 1:
            acc = base if acc is None else acc * base
        n >>= 1
        if n:
            base = base * base
    return acc


def _pow(x, e):
    ef = float(e)
    if ef == int(ef):
        ei = int(ef)
        if ei == 0:
            return jnp.ones_like(x)
        if ei > 0:
            return _ipow(x, ei)
    return x ** ef  # general (non-integer) exponent fallback


def _focal_kernel(pred_ref, tgt_ref, out_ref, *,
                  alpha, beta, total, rows, row_tile, steps_per_part,
                  full_tiles, grid_tiles, lane_tidy):
    c = pl.program_id(0)            # parallel axis (2-way TC split on v7x)
    i = pl.program_id(1)            # reduction axis
    tile_idx = c * steps_per_part + i

    @pl.when(i == 0)
    def _():
        out_ref[...] = jnp.zeros_like(out_ref)

    p = pred_ref[...].astype(jnp.float32)
    t = tgt_ref[...].astype(jnp.float32)

    eps = jnp.float32(1e-6)
    pc = jnp.clip(p, eps, 1.0 - eps)
    omp = 1.0 - pc

    pos = t > 0.5
    # Fused positive/negative branches: one log per element.
    sel = jnp.where(pos, pc, omp)                         # log argument
    base = jnp.where(pos, omp, pc)                        # ^alpha argument
    w = jnp.where(pos, jnp.float32(1.0), _pow(1.0 - t, beta))
    term = jnp.log(sel) * _pow(base, alpha) * w           # pos_loss + neg_loss
    cnt = jnp.where(pos, jnp.float32(1.0), jnp.float32(0.0))

    def _accumulate(loss_term, cnt_term):
        # Per-lane partial sums accumulated into the VMEM-resident output block.
        out_ref[0:1, :] += jnp.sum(loss_term, axis=0, keepdims=True)
        out_ref[1:2, :] += jnp.sum(cnt_term, axis=0, keepdims=True)

    if full_tiles >= grid_tiles:
        # Every grid tile is fully valid: no mask code generated at all.
        _accumulate(term, cnt)
    else:
        @pl.when(tile_idx < full_tiles)
        def _():
            _accumulate(term, cnt)

        @pl.when(tile_idx >= full_tiles)
        def _():
            # Tail / duplicated tiles only: build a validity mask.
            row_idx = jax.lax.broadcasted_iota(jnp.int32, term.shape, 0)
            if lane_tidy:
                valid = (tile_idx * row_tile + row_idx) < rows
            else:
                lane_idx = jax.lax.broadcasted_iota(jnp.int32, term.shape, 1)
                flat = (tile_idx * (row_tile * LANES)
                        + row_idx * LANES + lane_idx)
                valid = flat < total
            zero = jnp.float32(0.0)
            _accumulate(jnp.where(valid, term, zero),
                        jnp.where(valid, cnt, zero))


def _keep_dtype(x):
    if x.dtype == jnp.float32 or x.dtype == jnp.bfloat16:
        return x
    return x.astype(jnp.float32)


def _bilinear_resize_align_corners(x, out_h, out_w):
    """F.interpolate(mode='bilinear', align_corners=True) for NCHW, plain JAX glue."""
    n, c, in_h, in_w = x.shape
    if in_h == out_h and in_w == out_w:
        return x
    ys = jnp.linspace(0.0, in_h - 1.0, out_h) if out_h > 1 else jnp.zeros((out_h,))
    xs = jnp.linspace(0.0, in_w - 1.0, out_w) if out_w > 1 else jnp.zeros((out_w,))
    y0 = jnp.clip(jnp.floor(ys).astype(jnp.int32), 0, in_h - 1)
    x0 = jnp.clip(jnp.floor(xs).astype(jnp.int32), 0, in_w - 1)
    y1 = jnp.clip(y0 + 1, 0, in_h - 1)
    x1 = jnp.clip(x0 + 1, 0, in_w - 1)
    wy = (ys - y0.astype(ys.dtype))[None, None, :, None]
    wx = (xs - x0.astype(xs.dtype))[None, None, None, :]
    g = lambda yi, xi: x[:, :, yi, :][:, :, :, xi]
    top = g(y0, x0) * (1 - wx) + g(y0, x1) * wx
    bot = g(y1, x0) * (1 - wx) + g(y1, x1) * wx
    return top * (1 - wy) + bot * wy


def focal_loss(pred, target, alpha=2, beta=4, *, _row_tile=None):
    pred = _keep_dtype(pred)
    target = _keep_dtype(target)
    if pred.shape != target.shape:
        target = _bilinear_resize_align_corners(
            target.astype(jnp.float32), pred.shape[2], pred.shape[3])

    total = int(pred.size)
    rows = -(-total // LANES)
    lane_tidy = (total % LANES == 0)

    if lane_tidy:
        # No HBM pad copy in the common path.
        def to2d(x):
            return x.reshape(rows, LANES)
    else:
        pad = rows * LANES - total

        def to2d(x):
            flat = x.reshape(-1)
            flat = jnp.pad(flat, (0, pad))
            return flat.reshape(rows, LANES)

    pred2d = to2d(pred)
    tgt2d = to2d(target)

    # Row-tile selection: biggest tile keeping 2 inputs x 2 buffers <= ~16 MiB.
    if _row_tile is not None:
        row_tile = int(_row_tile)
    elif rows <= MAX_ROW_TILE:
        row_tile = rows            # block == full array dim (always legal)
    else:
        row_tile = MAX_ROW_TILE    # multiple of 8; ragged tail handled in-kernel

    num_tiles = -(-rows // row_tile)
    # Always 2-way split on the leading "parallel" axis when there is more than
    # one tile, so v7x can shard across both TensorCores.  Odd tile counts get
    # one duplicated (clamped) tile that the in-kernel mask zeroes out.
    if num_tiles >= 2:
        parts = 2
        steps = -(-num_tiles // 2)
    else:
        parts = 1
        steps = num_tiles
    grid_tiles = parts * steps
    full_tiles = total // (row_tile * LANES)
    last_block = num_tiles - 1

    kernel = functools.partial(
        _focal_kernel, alpha=alpha, beta=beta, total=total, rows=rows,
        row_tile=int(row_tile), steps_per_part=int(steps),
        full_tiles=int(full_tiles), grid_tiles=int(grid_tiles),
        lane_tidy=bool(lane_tidy))

    def in_map(c, i):
        return (jnp.minimum(c * steps + i, last_block), 0)

    bytes_in = int(pred2d.size * pred2d.dtype.itemsize
                   + tgt2d.size * tgt2d.dtype.itemsize)
    cost = pl.CostEstimate(flops=20 * total, transcendentals=total,
                           bytes_accessed=bytes_in)

    partials = pl.pallas_call(
        kernel,
        out_shape=jax.ShapeDtypeStruct((parts, 8, LANES), jnp.float32),
        grid_spec=pltpu.PrefetchScalarGridSpec(
            num_scalar_prefetch=0,
            grid=(parts, steps),
            in_specs=[
                pl.BlockSpec((row_tile, LANES), in_map),
                pl.BlockSpec((row_tile, LANES), in_map),
            ],
            out_specs=pl.BlockSpec((None, 8, LANES), lambda c, i: (c, 0, 0)),
        ),
        compiler_params=pltpu.CompilerParams(
            dimension_semantics=("parallel", "arbitrary"),
            vmem_limit_bytes=VMEM_LIMIT_BYTES),
        cost_estimate=cost,
    )(pred2d, tgt2d)

    total_loss = jnp.sum(partials[:, 0, :])   # pos_loss + neg_loss
    num_pos = jnp.sum(partials[:, 1, :])

    # pos_loss == 0 whenever num_pos == 0, so this reproduces the module's
    # two-case formula exactly.
    denom = jnp.where(num_pos == 0, jnp.float32(1.0), num_pos)
    return -total_loss / denom


def _focal_loss_ref(pred, target, alpha=2, beta=4):
    """Pure-JAX reference mirroring the PyTorch forward (same-shape path)."""
    eps = 1e-6
    pos_inds = (target > 0.5).astype(jnp.float32)
    neg_inds = (target <= 0.5).astype(jnp.float32)
    p = jnp.clip(pred, eps, 1.0 - eps)
    pos_loss = jnp.sum(jnp.log(p) * (1 - p) ** alpha * pos_inds)
    neg_loss = jnp.sum(jnp.log(1 - p) * p ** alpha * (1 - target) ** beta * neg_inds)
    num_pos = jnp.sum(pos_inds)
    return jnp.where(num_pos == 0, -neg_loss,
                     -(pos_loss + neg_loss) / jnp.where(num_pos == 0, 1.0, num_pos))


if __name__ == "__main__":
    key = jax.random.PRNGKey(0)
    k1, k2, k3, k4 = jax.random.split(key, 4)

    # 1) Same-shape heatmap head (lane-tidy, single tile, no mask path).
    pred = jax.nn.sigmoid(jax.random.normal(k1, (2, 4, 16, 16), jnp.float32))
    target = jax.random.uniform(k2, (2, 4, 16, 16), jnp.float32)
    loss = focal_loss(pred, target)
    jax.block_until_ready(loss)
    ref = _focal_loss_ref(pred, target)
    assert jnp.allclose(loss, ref, rtol=1e-4, atol=1e-5), (loss, ref)

    # 2) Ragged flat size (not a multiple of 128) -> element-masked tail tile.
    pred_r = jax.nn.sigmoid(jax.random.normal(k3, (1, 2, 9, 13), jnp.float32))
    target_r = jax.random.uniform(k4, (1, 2, 9, 13), jnp.float32)
    loss_r = focal_loss(pred_r, target_r)
    jax.block_until_ready(loss_r)
    ref_r = _focal_loss_ref(pred_r, target_r)
    assert jnp.allclose(loss_r, ref_r, rtol=1e-4, atol=1e-5), (loss_r, ref_r)

    # 3) Multi-tile with an odd tile count -> forced 2-way core split plus one
    #    duplicated (masked-to-zero) tile; small row_tile to exercise the loop.
    pred_m = jax.nn.sigmoid(jax.random.normal(k1, (1, 4, 32, 40), jnp.float32))
    target_m = jax.random.uniform(k2, (1, 4, 32, 40), jnp.float32)
    loss_m = focal_loss(pred_m, target_m, _row_tile=8)
    jax.block_until_ready(loss_m)
    ref_m = _focal_loss_ref(pred_m, target_m)
    assert jnp.allclose(loss_m, ref_m, rtol=1e-4, atol=1e-5), (loss_m, ref_m)

    # 4) Shape mismatch -> bilinear (align_corners=True) resize of the target.
    target_s = jax.random.uniform(k4, (2, 4, 8, 8), jnp.float32)
    loss_s = focal_loss(pred, target_s)
    jax.block_until_ready(loss_s)
    ref_s = _focal_loss_ref(pred, _bilinear_resize_align_corners(target_s, 16, 16))
    assert jnp.allclose(loss_s, ref_s, rtol=1e-4, atol=1e-5), (loss_s, ref_s)

    print("KERNEL_OK")
</pallas_src>

<mosaic_0001>
module attributes {stable_mosaic.version = 11 : i64} {
  func.func @_focal_kernel(%arg0: i32, %arg1: i32, %arg2: memref<16x128xf32, #tpu.memory_space<vmem>>, %arg3: memref<16x128xf32, #tpu.memory_space<vmem>>, %arg4: memref<1x8x128xf32, #tpu.memory_space<vmem>>) attributes {dimension_semantics = [#tpu.dimension_semantics<parallel>, #tpu.dimension_semantics<arbitrary>], iteration_bounds = array<i64: 1, 1>, scalar_prefetch = 0 : i64, scratch_operands = 0 : i64, tpu.core_type = #tpu.core_type<tc>, window_params = [{transform_indices = @transform_0, window_bounds = array<i64: 16, 128>}, {transform_indices = @transform_1, window_bounds = array<i64: 16, 128>}, {transform_indices = @transform_2, window_bounds = array<i64: 1, 8, 128>}]} {
    %c0_i32 = arith.constant 0 : i32
    %0 = arith.cmpi eq, %arg1, %c0_i32 : i32
    %1 = arith.extui %0 : i1 to i32
    %c0_i32_0 = arith.constant 0 : i32
    %2 = arith.cmpi ne, %1, %c0_i32_0 : i32
    scf.if %2 {
      %cst_25 = arith.constant 0.000000e+00 : f32
      %45 = vector.broadcast %cst_25 : f32 to vector<8x128xf32>
      %c0_26 = arith.constant 0 : index
      %c0_27 = arith.constant 0 : index
      %c0_28 = arith.constant 0 : index
      %46 = vector.load %arg4[%c0_26, %c0_27, %c0_28] : memref<1x8x128xf32, #tpu.memory_space<vmem>>, vector<1x8x128xf32>
      %47 = vector.shape_cast %46 : vector<1x8x128xf32> to vector<8x128xf32>
      %48 = vector.shape_cast %45 : vector<8x128xf32> to vector<1x8x128xf32>
      tpu.vector_store %arg4[%c0_26, %c0_27, %c0_28], %48 {strides = array<i32>} : memref<1x8x128xf32, #tpu.memory_space<vmem>>, vector<1x8x128xf32>,
    } else {
    }
    %c0 = arith.constant 0 : index
    %c0_1 = arith.constant 0 : index
    %3 = vector.load %arg2[%c0, %c0_1] : memref<16x128xf32, #tpu.memory_space<vmem>>, vector<16x128xf32>
    %c0_2 = arith.constant 0 : index
    %c0_3 = arith.constant 0 : index
    %4 = vector.load %arg3[%c0_2, %c0_3] : memref<16x128xf32, #tpu.memory_space<vmem>>, vector<16x128xf32>
    %cst = arith.constant 1.000000e+00 : f32
    %cst_4 = arith.constant 9.99999997E-7 : f32
    %5 = arith.subf %cst, %cst_4 : f32
    %cst_5 = arith.constant 9.99999997E-7 : f32
    %6 = vector.broadcast %cst_5 : f32 to vector<16x128xf32>
    %7 = arith.maximumf %6, %3 : vector<16x128xf32>
    %8 = vector.broadcast %5 : f32 to vector<16x128xf32>
    %9 = arith.minimumf %8, %7 : vector<16x128xf32>
    %cst_6 = arith.constant 1.000000e+00 : f32
    %10 = vector.broadcast %cst_6 : f32 to vector<16x128xf32>
    %11 = arith.subf %10, %9 : vector<16x128xf32>
    %cst_7 = arith.constant 5.000000e-01 : f32
    %12 = vector.broadcast %cst_7 : f32 to vector<16x128xf32>
    %13 = arith.cmpf ogt, %4, %12 : vector<16x128xf32>
    %14 = arith.select %13, %9, %11 : vector<16x128xi1>, vector<16x128xf32>
    %15 = arith.select %13, %11, %9 : vector<16x128xi1>, vector<16x128xf32>
    %cst_8 = arith.constant 1.000000e+00 : f32
    %16 = vector.broadcast %cst_8 : f32 to vector<16x128xf32>
    %17 = arith.subf %16, %4 : vector<16x128xf32>
    %18 = arith.mulf %17, %17 : vector<16x128xf32>
    %19 = arith.mulf %18, %18 : vector<16x128xf32>
    %cst_9 = arith.constant 1.000000e+00 : f32
    %20 = vector.broadcast %cst_9 : f32 to vector<16x128xf32>
    %21 = arith.select %13, %20, %19 : vector<16x128xi1>, vector<16x128xf32>
    %22 = math.log %14 : vector<16x128xf32>
    %23 = arith.mulf %15, %15 : vector<16x128xf32>
    %24 = arith.mulf %22, %23 : vector<16x128xf32>
    %25 = arith.mulf %24, %21 : vector<16x128xf32>
    %cst_10 = arith.constant 1.000000e+00 : f32
    %cst_11 = arith.constant 0.000000e+00 : f32
    %26 = vector.broadcast %cst_10 : f32 to vector<16x128xf32>
    %27 = vector.broadcast %cst_11 : f32 to vector<16x128xf32>
    %28 = arith.select %13, %26, %27 : vector<16x128xi1>, vector<16x128xf32>
    %c0_12 = arith.constant 0 : index
    %c0_13 = arith.constant 0 : index
    %c0_14 = arith.constant 0 : index
    %29 = vector.load %arg4[%c0_12, %c0_13, %c0_14] : memref<1x8x128xf32, #tpu.memory_space<vmem>>, vector<1x1x128xf32>
    %30 = vector.shape_cast %29 : vector<1x1x128xf32> to vector<1x128xf32>
    %cst_15 = arith.constant dense<0.000000e+00> : vector<128xf32>
    %31 = vector.multi_reduction <add>, %25, %cst_15 [0] : vector<16x128xf32> to vector<128xf32>
    %32 = vector.shape_cast %31 : vector<128xf32> to vector<1x128xf32>
    %33 = arith.addf %30, %32 : vector<1x128xf32>
    %c0_16 = arith.constant 0 : index
    %c0_17 = arith.constant 0 : index
    %c0_18 = arith.constant 0 : index
    %34 = vector.load %arg4[%c0_16, %c0_17, %c0_18] : memref<1x8x128xf32, #tpu.memory_space<vmem>>, vector<1x1x128xf32>
    %35 = vector.shape_cast %34 : vector<1x1x128xf32> to vector<1x128xf32>
    %36 = vector.shape_cast %33 : vector<1x128xf32> to vector<1x1x128xf32>
    tpu.vector_store %arg4[%c0_16, %c0_17, %c0_18], %36 {strides = array<i32>} : memref<1x8x128xf32, #tpu.memory_space<vmem>>, vector<1x1x128xf32>,
    %c0_19 = arith.constant 0 : index
    %c1 = arith.constant 1 : index
    %c0_20 = arith.constant 0 : index
    %37 = vector.load %arg4[%c0_19, %c1, %c0_20] : memref<1x8x128xf32, #tpu.memory_space<vmem>>, vector<1x1x128xf32>
    %38 = vector.shape_cast %37 : vector<1x1x128xf32> to vector<1x128xf32>
    %cst_21 = arith.constant dense<0.000000e+00> : vector<128xf32>
    %39 = vector.multi_reduction <add>, %28, %cst_21 [0] : vector<16x128xf32> to vector<128xf32>
    %40 = vector.shape_cast %39 : vector<128xf32> to vector<1x128xf32>
    %41 = arith.addf %38, %40 : vector<1x128xf32>
    %c0_22 = arith.constant 0 : index
    %c1_23 = arith.constant 1 : index
    %c0_24 = arith.constant 0 : index
    %42 = vector.load %arg4[%c0_22, %c1_23, %c0_24] : memref<1x8x128xf32, #tpu.memory_space<vmem>>, vector<1x1x128xf32>
    %43 = vector.shape_cast %42 : vector<1x1x128xf32> to vector<1x128xf32>
    %44 = vector.shape_cast %41 : vector<1x128xf32> to vector<1x1x128xf32>
    tpu.vector_store %arg4[%c0_22, %c1_23, %c0_24], %44 {strides = array<i32>} : memref<1x8x128xf32, #tpu.memory_space<vmem>>, vector<1x1x128xf32>,
    return
  }
  func.func @transform_0(%arg0: i32, %arg1: i32) -> (i32, i32) {
    %c1_i32 = arith.constant 1 : i32
    %0 = arith.muli %arg0, %c1_i32 : i32
    %1 = arith.addi %0, %arg1 : i32
    %c0_i32 = arith.constant 0 : i32
    %2 = arith.minsi %1, %c0_i32 : i32
    %c0_i32_0 = arith.constant 0 : i32
    %c0_i32_1 = arith.constant 0 : i32
    return %2, %c0_i32_0 : i32, i32
  }
  func.func @transform_1(%arg0: i32, %arg1: i32) -> (i32, i32) {
    %c1_i32 = arith.constant 1 : i32
    %0 = arith.muli %arg0, %c1_i32 : i32
    %1 = arith.addi %0, %arg1 : i32
    %c0_i32 = arith.constant 0 : i32
    %2 = arith.minsi %1, %c0_i32 : i32
    %c0_i32_0 = arith.constant 0 : i32
    %c0_i32_1 = arith.constant 0 : i32
    return %2, %c0_i32_0 : i32, i32
  }
  func.func @transform_2(%arg0: i32, %arg1: i32) -> (i32, i32, i32) {
    %c0_i32 = arith.constant 0 : i32
    %c0_i32_0 = arith.constant 0 : i32
    %c0_i32_1 = arith.constant 0 : i32
    return %arg0, %c0_i32, %c0_i32_0 : i32, i32, i32
  }
}

</mosaic_0001>

<llo_original>
// kernel: tpu_custom_call.1
$region0: #{tpu_custom_call.1}
  #allocation0 [shape = 'u32[]', space=smem, size = 0x4, offset = 0x4, fixed_abs, tag = 'smem constant byte address 0x4 - core index']
  #allocation1 [shape = 'u32[72,128]{1,0:T(1,128)}', space=vmem, size = 0x9000, scoped, tag = 'internal scratch']
  %s0 = inlined_call_operand.hbm [shape: f32[16,128], index: 0, kind: input, shape index: {}]
  %s1 = inlined_call_operand.hbm [shape: f32[16,128], index: 1, kind: input, shape index: {}]
  %s2 = inlined_call_operand.hbm [shape: f32[1,8,128], index: 2, kind: output, shape index: {}]
  %s3 = sld [smem:[#allocation0]]
  $region30: #{tpu_custom_call.1} parent=0
    _
  %s5 = ssub.s32 1, %s3
  %s6 = scalar_select 0, %s5, %s3
  $region1: #{tpu_custom_call.1} parent=0
    #allocation2 [shape = 'u8[8192]{0}', space=vmem, size = 0x2000, scoped, tag = 'input window, operand 0, single buffered']
    #allocation3 [shape = 's32[1]{0}', space=sflag, size = 0x4, scoped, tag = 'scoped memory for tpu_custom_call.1']
    #allocation4 [shape = 's32[1]{0}', space=sflag, size = 0x4, scoped, tag = 'scoped memory for tpu_custom_call.1']
    #allocation5 [shape = 'u8[8192]{0}', space=vmem, size = 0x2000, scoped, tag = 'input window, operand 1, single buffered']
    #allocation6 [shape = 's32[1]{0}', space=sflag, size = 0x4, scoped, tag = 'scoped memory for tpu_custom_call.1']
    #allocation7 [shape = 'u8[4096]{0}', space=vmem, size = 0x1000, scoped, tag = 'output window, operand 0, single buffered']
    %7 = vsyncpa [#allocation3], 0
    %8 = vsyncpa [#allocation6], 0
    %9 = vsyncpa [#allocation4], 0
    // Predicated region
    $region2: #{tpu_custom_call.1} parent=1 // pred_check
      _
    $region3: #{tpu_custom_call.1} parent=1 // pred_check_branch
      %11 = sbr.rel (0) target = $region5
    $region4: #{tpu_custom_call.1} parent=1 // pred_region
      %s12 = sadd.s32 0, 0
      %p13 = scmp.lt.s32.totalorder %s12, 0
      %s14 = scalar_select %p13, %s12, 0
      %s15 = smul.u32 2, %s14
      %17 = vsyncadd [#allocation3], 0
      %s18 = smul.addr %s15, 8
      %s19 = scalar_lea.hbm %s0, %s18
      %s20 = sshll.u32 %s19, 4
      %s21 = int_to_ptr.hbm [resolvable:$true] %s20
      %s22 = sshll.u32 [#allocation2], 4
      %s23 = int_to_ptr.vmem [resolvable:$true] %s22
      %28 = dma.hbm_to_vmem [thread:$0]  %s21, 256, %s23, [#allocation3], 128, 128, 8
    $region5: #{tpu_custom_call.1} parent=1 // pred_fallthru
      _
    // Predicated region
    $region6: #{tpu_custom_call.1} parent=1 // pred_check
      _
    $region7: #{tpu_custom_call.1} parent=1 // pred_check_branch
      %30 = sbr.rel (0) target = $region9
    $region8: #{tpu_custom_call.1} parent=1 // pred_region
      %s31 = sadd.s32 0, 0
      %p32 = scmp.lt.s32.totalorder %s31, 0
      %s33 = scalar_select %p32, %s31, 0
      %s34 = smul.u32 2, %s33
      %36 = vsyncadd [#allocation6], 0
      %s37 = smul.addr %s34, 8
      %s38 = scalar_lea.hbm %s1, %s37
      %s39 = sshll.u32 %s38, 4
      %s40 = int_to_ptr.hbm [resolvable:$true] %s39
      %s41 = sshll.u32 [#allocation5], 4
      %s42 = int_to_ptr.vmem [resolvable:$true] %s41
      %47 = dma.hbm_to_vmem [thread:$0]  %s40, 256, %s42, [#allocation6], 128, 128, 8
    $region9: #{tpu_custom_call.1} parent=1 // pred_fallthru
      _
    // Predicated region
    $region10: #{tpu_custom_call.1} parent=1 // pred_check
      _
    $region11: #{tpu_custom_call.1} parent=1 // pred_check_branch
      %49 = sbr.rel (0) target = $region13
    $region12: #{tpu_custom_call.1} parent=1 // pred_region
      %51 = dma.done [#allocation3], 256
    $region13: #{tpu_custom_call.1} parent=1 // pred_fallthru
      _
    // Predicated region
    $region14: #{tpu_custom_call.1} parent=1 // pred_check
      _
    $region15: #{tpu_custom_call.1} parent=1 // pred_check_branch
      %53 = sbr.rel (0) target = $region17
    $region16: #{tpu_custom_call.1} parent=1 // pred_region
      %55 = dma.done [#allocation6], 256
    $region17: #{tpu_custom_call.1} parent=1 // pred_fallthru
      _
    %s56 = sadd.s32 0, 0
    %p57 = scmp.lt.s32.totalorder %s56, 0
    %s58 = scalar_select %p57, %s56, 0
    %s59 = smul.u32 2, %s58
    %s60 = sadd.s32 0, 0
    %p61 = scmp.lt.s32.totalorder %s60, 0
    %s62 = scalar_select %p61, %s60, 0
    %s63 = smul.u32 2, %s62
    %p64 = scmp.eq.s32.totalorder 0, 0
    // Predicated region
    $region18: #{tpu_custom_call.1} parent=1 // pred_check
      %p65 = pneg %p64
    $region19: #{tpu_custom_call.1} parent=1 // pred_check_branch
      %67 = sbr.rel (%p65) target = $region21
    $region20: #{tpu_custom_call.1} parent=1 // pred_region
      %68 = vst [vmem:[#allocation7] sm:$0xff] 0.0
    $region21: #{tpu_custom_call.1} parent=1 // pred_fallthru
      _
    %v69 = vld [vmem:[#allocation2] sm:$0xff]
    %v70 = vld [vmem:[#allocation2 + $0x8] sm:$0xff]
    %v71 = vld [vmem:[#allocation5] sm:$0xff]
    %v72 = vld [vmem:[#allocation5 + $0x8] sm:$0xff]
    %v73 = vmax.f32 %v69, 1e-06
    %v74 = vmax.f32 %v70, 1e-06
    %v75 = vmin.f32 %v73, 0.999999
    %v76 = vmin.f32 %v74, 0.999999
    %v77 = vsub.f32 1.0, %v75
    %v78 = vsub.f32 1.0, %v76
    %vm79 = vcmp.gt.f32.partialorder %v71, 0.5
    %vm80 = vcmp.gt.f32.partialorder %v72, 0.5
    %v81 = vsel %vm79, %v75, %v77
    %v82 = vsel %vm80, %v76, %v78
    %v83 = vsel %vm79, %v77, %v75
    %v84 = vsel %vm80, %v78, %v76
    %v85 = vsub.f32 1.0, %v71
    %v86 = vsub.f32 1.0, %v72
    %v87 = vmul.f32 %v85, %v85
    %v88 = vmul.f32 %v86, %v86
    %v89 = vmul.f32 %v87, %v87
    %v90 = vmul.f32 %v88, %v88
    %v91 = vsel %vm79, 1.0, %v89
    %v92 = vsel %vm80, 1.0, %v90
    %v93 = vlog2.pop %v81
    %v94 = vmul.f32 %v93, 0.6931472
    %v95 = vlog2.pop %v82
    %v96 = vmul.f32 %v95, 0.6931472
    %v97 = vmul.f32 %v83, %v83
    %v98 = vmul.f32 %v84, %v84
    %v99 = vmul.f32 %v94, %v97
    %v100 = vmul.f32 %v96, %v98
    %v101 = vmul.f32 %v99, %v91
    %v102 = vmul.f32 %v100, %v92
    %v103 = vsel %vm79, 1.0, 0.0
    %v104 = vsel %vm80, 1.0, 0.0
    %v105 = vld [vmem:[#allocation7] sm:$0x1]
    %v106 = vadd.f32 %v101, %v102
    %v107 = vrot.slane %v106, 4
    %v108 = vadd.f32 %v106, %v107
    %v109 = vrot.slane %v108, 2
    %v110 = vadd.f32 %v108, %v109
    %v111 = vrot.slane %v110, 1
    %v112 = vadd.f32 %v110, %v111
    %v113 = vadd.f32 %v105, %v112
    %114 = vst [vmem:[#allocation7] sm:$0x1] %v113
    %v115 = vld [vmem:[#allocation7 + $0x1] sm:$0x1]
    %v116 = vadd.f32 %v103, %v104
    %v117 = vrot.slane %v116, 4
    %v118 = vadd.f32 %v116, %v117
    %v119 = vrot.slane %v118, 2
    %v120 = vadd.f32 %v118, %v119
    %v121 = vrot.slane %v120, 1
    %v122 = vadd.f32 %v120, %v121
    %v123 = vadd.f32 %v115, %v122
    %124 = vst [vmem:[#allocation7 + $0x1] sm:$0x1] %v123
    // Predicated region
    $region22: #{tpu_custom_call.1} parent=1 // pred_check
      _
    $region23: #{tpu_custom_call.1} parent=1 // pred_check_branch
      %126 = sbr.rel (0) target = $region25
    $region24: #{tpu_custom_call.1} parent=1 // pred_region
      %128 = vsyncadd [#allocation4], 0
      %s130 = sshll.u32 [#allocation7], 4
      %s131 = int_to_ptr.vmem [resolvable:$true] %s130
      %s132 = sshll.u32 %s2, 4
      %s133 = int_to_ptr.hbm [resolvable:$true] %s132
      %135 = dma.vmem_to_hbm [thread:$0]  %s131, 128, %s133, [#allocation4]
    $region25: #{tpu_custom_call.1} parent=1 // pred_fallthru
      _
    // Predicated region
    $region26: #{tpu_custom_call.1} parent=1 // pred_check
      _
    $region27: #{tpu_custom_call.1} parent=1 // pred_check_branch
      %137 = sbr.rel (0) target = $region29
    $region28: #{tpu_custom_call.1} parent=1 // pred_region
      %139 = dma.done [#allocation4], 128
    $region29: #{tpu_custom_call.1} parent=1 // pred_fallthru
      _
    %140 = vsyncpa [#allocation3], 1
    %141 = vsyncpa [#allocation6], 1
    %142 = vsyncpa [#allocation4], 1

</llo_original>
